<compile_context>
chip_gen: v6e
topology: v6e:2x2x1
jax: 0.10.0
libtpu: 0.0.40
codegen_flags: <defaults>
</compile_context>

<pallas_src>
import jax
import jax.numpy as jnp
from jax.experimental import pallas as pl
from jax.experimental.pallas import tpu as pltpu

SMOOTH = 1e-6
LANES = 128


def _seg_loss_kernel(logits_ref, target_ref, stats_ref):
    """Per-(image, row-tile) partial statistics.

    logits_ref: (1, C, R_t, 128) native dtype.
    target_ref: (1, 1, R_t, 128) int32 (padded pixels hold -1).
    stats_ref : (1, 3C+1, 128) f32 lane-dense resident accumulator,
                rows [0:C)=inter, [C:2C)=pred_sum, [2C:3C)=targ_sum, [3C]=ce.
    """
    h = pl.program_id(1)

    @pl.when(h == 0)
    def _():
        stats_ref[...] = jnp.zeros_like(stats_ref)

    x = logits_ref[0].astype(jnp.float32)          # (C, R_t, 128), upcast in-kernel
    t = target_ref[0, 0]                           # (R_t, 128) int32
    C = x.shape[0]

    # Numerically stable softmax / logsumexp over the *leading* class axis:
    # C-1 full-vreg VALU ops (no cross-sublane XLU work).
    m = jnp.max(x, axis=0, keepdims=True)          # (1, R_t, 128)
    e = jnp.exp(x - m)                             # (C, R_t, 128)
    s = jnp.sum(e, axis=0, keepdims=True)          # (1, R_t, 128)
    inv_s = pl.reciprocal(s, approx=True)          # EUP approx ...
    inv_s = inv_s * (2.0 - s * inv_s)              # ... + one Newton step (keep!)
    probs = e * inv_s                              # (C, R_t, 128) softmax
    lse = (m + jnp.log(s))[0]                      # (R_t, 128) logsumexp

    def rowsum(a):                                 # (R_t, 128) -> (1, 128)
        return jnp.sum(a, axis=0, keepdims=True)

    # Per-class partial sums; the lane axis is kept (lane-dense accumulation),
    # per-tile ref updates are a handful of 128-wide sublane RMWs.
    ce_lane = rowsum(lse)                          # (1, 128)
    for c in range(C):                             # C is static; unrolled
        mc = t == c                                # (R_t, 128) one-hot row
        pc = probs[c]
        stats_ref[0, c:c + 1, :] += rowsum(jnp.where(mc, pc, 0.0))          # inter
        stats_ref[0, C + c:C + c + 1, :] += rowsum(pc)                       # pred
        stats_ref[0, 2 * C + c:2 * C + c + 1, :] += rowsum(
            mc.astype(jnp.float32))                                          # targ
        ce_lane = ce_lane - rowsum(jnp.where(mc, x[c], 0.0))                  # -x[tgt]
    stats_ref[0, 3 * C:3 * C + 1, :] += ce_lane


def _vmem_budgets():
    """(scratch budget for tile sizing, vmem_limit_bytes) per TPU generation."""
    try:
        cap = int(pltpu.get_tpu_info().vmem_capacity_bytes)
    except Exception:
        cap = 64 * 1024 * 1024                     # conservative: v7x per-core VMEM
    if cap >= 128 * 1024 * 1024:                   # v5e / v6e (128 MiB physical)
        return 48 * 1024 * 1024, 80 * 1024 * 1024
    return 24 * 1024 * 1024, 40 * 1024 * 1024      # v7x: 64 MiB per TensorCore


def _choose_rows(r0, C, itemsize, budget_bytes, max_rows=None):
    """Pick a row-tile size dividing the (possibly padded) row count.

    Returns (t_rows, n_tiles, r_pad)."""
    # Per-row VMEM cost: double-buffered logits + double-buffered int32 target
    # + ~6 live (C, rows, 128) f32 temporaries + a few (1, rows, 128) temps.
    per_row = LANES * (2 * C * itemsize + 2 * 4 + 4 * (6 * C + 4))
    cap = max(8, (budget_bytes // per_row) // 8 * 8)
    if max_rows is not None:
        cap = max(8, min(cap, (max_rows // 8) * 8))
    if r0 <= cap:
        return r0, 1, r0                           # single tile, no padding
    # Prefer a multiple-of-8 divisor of r0 (no padding, no tail tile).
    d = cap
    found = 0
    while d >= 8:
        if r0 % d == 0:
            found = d
            break
        d -= 8
    if found >= max(8, cap // 2):
        return found, r0 // found, r0
    # Otherwise use balanced tiles and pad the row axis (minimal padding);
    # padded pixels are corrected exactly in the wrapper.
    n_tiles = -(-r0 // cap)
    t_rows = -(-r0 // n_tiles)
    t_rows = -(-t_rows // 8) * 8                   # round up to a multiple of 8
    return t_rows, n_tiles, n_tiles * t_rows


def segmentation_loss(logits, target, weight_ce=0.5, weight_dice=0.5,
                      smooth=SMOOTH, max_rows=None):
    """Equivalent of SegmentationLoss(mode='multiclass')(logits, target)."""
    N, C, H, W = logits.shape
    if target.ndim == 4 and target.shape[1] == 1:
        target = target[:, 0]
    HW = H * W
    r0 = pl.cdiv(HW, LANES)

    budget, vmem_limit = _vmem_budgets()
    itemsize = jnp.dtype(logits.dtype).itemsize
    t_rows, n_tiles, r_pad = _choose_rows(r0, C, itemsize, budget, max_rows)
    hw_pad = r_pad * LANES
    n_pad = hw_pad - HW

    # Keep logits in their native dtype; the kernel upcasts after the load.
    logits_flat = logits.reshape(N, C, HW)
    target_flat = target.reshape(N, 1, HW).astype(jnp.int32)
    if n_pad:
        # Neutral padding: zero logits (uniform softmax) and label -1 (never
        # matches any class); the exact contribution is subtracted below.
        logits_flat = jnp.pad(logits_flat, ((0, 0), (0, 0), (0, n_pad)))
        target_flat = jnp.pad(target_flat, ((0, 0), (0, 0), (0, n_pad)),
                              constant_values=-1)
    logits_v = logits_flat.reshape(N, C, r_pad, LANES)
    target_v = target_flat.reshape(N, 1, r_pad, LANES)

    S = 3 * C + 1
    stats = pl.pallas_call(
        _seg_loss_kernel,
        out_shape=jax.ShapeDtypeStruct((N, S, LANES), jnp.float32),
        grid_spec=pltpu.PrefetchScalarGridSpec(
            num_scalar_prefetch=0,
            grid=(N, n_tiles),
            in_specs=[
                pl.BlockSpec((1, C, t_rows, LANES), lambda n, h: (n, 0, h, 0)),
                pl.BlockSpec((1, 1, t_rows, LANES), lambda n, h: (n, 0, h, 0)),
            ],
            out_specs=pl.BlockSpec((1, S, LANES), lambda n, h: (n, 0, 0)),
        ),
        compiler_params=pltpu.CompilerParams(
            dimension_semantics=("parallel", "arbitrary"),
            vmem_limit_bytes=vmem_limit),
    )(logits_v, target_v)

    full = jnp.sum(stats, axis=-1)                 # (N, 3C+1) tiny lane reduce
    inter = full[:, 0:C]                           # (N, C)
    pred_sum = full[:, C:2 * C]                    # (N, C)
    targ_sum = full[:, 2 * C:3 * C]                # (N, C)
    ce_total = jnp.sum(full[:, 3 * C])             # scalar

    if n_pad:
        # Exact correction of the neutral padding: each padded pixel added
        # log(C) to the CE sum and 1/C to every class's pred_sum.
        ce_total = ce_total - jnp.float32(N * n_pad) * jnp.log(jnp.float32(C))
        pred_sum = pred_sum - jnp.float32(n_pad) / jnp.float32(C)

    # CrossEntropyLoss with default 'mean' reduction over all N*H*W pixels.
    ce = ce_total / (N * HW)
    # Dice over softmax probabilities vs one-hot targets.
    dice_score = (2.0 * inter + smooth) / (pred_sum + targ_sum + smooth)
    dice = 1.0 - jnp.mean(dice_score)
    return weight_ce * ce + weight_dice * dice


def segmentation_loss_ref(logits, target, weight_ce=0.5, weight_dice=0.5,
                          smooth=SMOOTH):
    """Pure-JAX reference mirroring the PyTorch module (multiclass)."""
    N, C, H, W = logits.shape
    logp = jax.nn.log_softmax(logits.astype(jnp.float32), axis=1)
    oh = jax.nn.one_hot(target, C, axis=1, dtype=jnp.float32)   # (N, C, H, W)
    ce = -jnp.mean(jnp.sum(logp * oh, axis=1))
    prob = jax.nn.softmax(logits.astype(jnp.float32), axis=1)
    pf = prob.reshape(N, C, -1)
    tf = oh.reshape(N, C, -1)
    inter = jnp.sum(pf * tf, axis=-1)
    union = jnp.sum(pf, axis=-1) + jnp.sum(tf, axis=-1)
    dice = 1.0 - jnp.mean((2.0 * inter + smooth) / (union + smooth))
    return weight_ce * ce + weight_dice * dice


if __name__ == "__main__":
    key = jax.random.PRNGKey(0)
    k1, k2, k3, k4, k5, k6 = jax.random.split(key, 6)

    # Case 1: small shape, single row-tile per image (HW = 256 = 2 * 128).
    N, C, H, W = 2, 4, 16, 16
    logits = jax.random.normal(k1, (N, C, H, W), dtype=jnp.float32)
    target = jax.random.randint(k2, (N, H, W), 0, C, dtype=jnp.int32)
    loss = jax.block_until_ready(segmentation_loss(logits, target))
    ref = jax.block_until_ready(segmentation_loss_ref(logits, target))
    assert jnp.allclose(loss, ref, atol=1e-4, rtol=1e-4), (loss, ref)

    # Case 2: multi-tile resident accumulator (R = 72 rows, forced 24-row
    # tiles dividing R exactly -> 3 tiles, no padding, no masking).
    N2, C2, H2, W2 = 1, 4, 96, 96
    logits2 = jax.random.normal(k3, (N2, C2, H2, W2), dtype=jnp.float32)
    target2 = jax.random.randint(k4, (N2, H2, W2), 0, C2, dtype=jnp.int32)
    loss2 = jax.block_until_ready(segmentation_loss(logits2, target2, max_rows=32))
    ref2 = jax.block_until_ready(segmentation_loss_ref(logits2, target2))
    assert jnp.allclose(loss2, ref2, atol=1e-4, rtol=1e-4), (loss2, ref2)

    # Case 3: HW not a multiple of 128 (HW = 1296) + forced tiny tiles ->
    # padded rows with exact wrapper-side correction.
    N3, C3, H3, W3 = 1, 3, 36, 36
    logits3 = jax.random.normal(k5, (N3, C3, H3, W3), dtype=jnp.float32)
    target3 = jax.random.randint(k6, (N3, H3, W3), 0, C3, dtype=jnp.int32)
    loss3 = jax.block_until_ready(segmentation_loss(logits3, target3, max_rows=8))
    ref3 = jax.block_until_ready(segmentation_loss_ref(logits3, target3))
    assert jnp.allclose(loss3, ref3, atol=1e-4, rtol=1e-4), (loss3, ref3)

    print("KERNEL_OK")
</pallas_src>

<mosaic_0001>
module attributes {stable_mosaic.version = 11 : i64} {
  func.func @_seg_loss_kernel(%arg0: i32, %arg1: i32, %arg2: memref<1x4x2x128xf32, #tpu.memory_space<vmem>>, %arg3: memref<1x1x2x128xi32, #tpu.memory_space<vmem>>, %arg4: memref<1x13x128xf32, #tpu.memory_space<vmem>>) attributes {dimension_semantics = [#tpu.dimension_semantics<parallel>, #tpu.dimension_semantics<arbitrary>], iteration_bounds = array<i64: 2, 1>, scalar_prefetch = 0 : i64, scratch_operands = 0 : i64, tpu.core_type = #tpu.core_type<tc>, window_params = [{transform_indices = @transform_0, window_bounds = array<i64: 1, 4, 2, 128>}, {transform_indices = @transform_1, window_bounds = array<i64: 1, 1, 2, 128>}, {transform_indices = @transform_2, window_bounds = array<i64: 1, 13, 128>}]} {
    %c0_i32 = arith.constant 0 : i32
    %0 = arith.cmpi eq, %arg1, %c0_i32 : i32
    %1 = arith.extui %0 : i1 to i32
    %c0_i32_0 = arith.constant 0 : i32
    %2 = arith.cmpi ne, %1, %c0_i32_0 : i32
    scf.if %2 {
      %cst_102 = arith.constant 0.000000e+00 : f32
      %188 = vector.broadcast %cst_102 : f32 to vector<1x13x128xf32>
      %c0_103 = arith.constant 0 : index
      %c0_104 = arith.constant 0 : index
      %c0_105 = arith.constant 0 : index
      %189 = vector.load %arg4[%c0_103, %c0_104, %c0_105] : memref<1x13x128xf32, #tpu.memory_space<vmem>>, vector<1x13x128xf32>
      tpu.vector_store %arg4[%c0_103, %c0_104, %c0_105], %188 {strides = array<i32>} : memref<1x13x128xf32, #tpu.memory_space<vmem>>, vector<1x13x128xf32>,
    } else {
    }
    %c0 = arith.constant 0 : index
    %c0_1 = arith.constant 0 : index
    %c0_2 = arith.constant 0 : index
    %c0_3 = arith.constant 0 : index
    %3 = vector.load %arg2[%c0, %c0_1, %c0_2, %c0_3] : memref<1x4x2x128xf32, #tpu.memory_space<vmem>>, vector<1x4x2x128xf32>
    %4 = vector.shape_cast %3 : vector<1x4x2x128xf32> to vector<4x2x128xf32>
    %c0_4 = arith.constant 0 : index
    %c0_5 = arith.constant 0 : index
    %c0_6 = arith.constant 0 : index
    %c0_7 = arith.constant 0 : index
    %5 = vector.load %arg3[%c0_4, %c0_5, %c0_6, %c0_7] : memref<1x1x2x128xi32, #tpu.memory_space<vmem>>, vector<1x1x2x128xi32>
    %6 = vector.shape_cast %5 : vector<1x1x2x128xi32> to vector<2x128xi32>
    %cst = arith.constant dense<0xFF800000> : vector<2x128xf32>
    %7 = vector.multi_reduction <maximumf>, %4, %cst [0] : vector<4x2x128xf32> to vector<2x128xf32>
    %8 = vector.shape_cast %7 : vector<2x128xf32> to vector<1x2x128xf32>
    %9 = vector.broadcast %8 : vector<1x2x128xf32> to vector<4x2x128xf32>
    %10 = arith.subf %4, %9 : vector<4x2x128xf32>
    %11 = math.exp %10 : vector<4x2x128xf32>
    %cst_8 = arith.constant dense<0.000000e+00> : vector<2x128xf32>
    %12 = vector.multi_reduction <add>, %11, %cst_8 [0] : vector<4x2x128xf32> to vector<2x128xf32>
    %13 = vector.shape_cast %12 : vector<2x128xf32> to vector<1x2x128xf32>
    %14 = tpu.reciprocal %13 {approx = true} : vector<1x2x128xf32> -> vector<1x2x128xf32>
    %15 = arith.mulf %13, %14 : vector<1x2x128xf32>
    %cst_9 = arith.constant 2.000000e+00 : f32
    %16 = vector.broadcast %cst_9 : f32 to vector<1x2x128xf32>
    %17 = arith.subf %16, %15 : vector<1x2x128xf32>
    %18 = arith.mulf %14, %17 : vector<1x2x128xf32>
    %19 = vector.broadcast %18 : vector<1x2x128xf32> to vector<4x2x128xf32>
    %20 = arith.mulf %11, %19 : vector<4x2x128xf32>
    %21 = math.log %13 : vector<1x2x128xf32>
    %22 = arith.addf %8, %21 : vector<1x2x128xf32>
    %23 = vector.shape_cast %22 : vector<1x2x128xf32> to vector<2x128xf32>
    %cst_10 = arith.constant dense<0.000000e+00> : vector<128xf32>
    %24 = vector.multi_reduction <add>, %23, %cst_10 [0] : vector<2x128xf32> to vector<128xf32>
    %25 = vector.shape_cast %24 : vector<128xf32> to vector<1x128xf32>
    %c0_i32_11 = arith.constant 0 : i32
    %26 = vector.broadcast %c0_i32_11 : i32 to vector<2x128xi32>
    %27 = arith.cmpi eq, %6, %26 : vector<2x128xi32>
    %28 = vector.extract_strided_slice %20 {offsets = [0, 0, 0], sizes = [1, 2, 128], strides = [1, 1, 1]} : vector<4x2x128xf32> to vector<1x2x128xf32>
    %29 = vector.shape_cast %28 : vector<1x2x128xf32> to vector<2x128xf32>
    %c0_12 = arith.constant 0 : index
    %c0_13 = arith.constant 0 : index
    %c0_14 = arith.constant 0 : index
    %30 = vector.load %arg4[%c0_12, %c0_13, %c0_14] : memref<1x13x128xf32, #tpu.memory_space<vmem>>, vector<1x1x128xf32>
    %31 = vector.shape_cast %30 : vector<1x1x128xf32> to vector<1x128xf32>
    %cst_15 = arith.constant 0.000000e+00 : f32
    %32 = vector.broadcast %cst_15 : f32 to vector<2x128xf32>
    %33 = arith.select %27, %29, %32 : vector<2x128xi1>, vector<2x128xf32>
    %cst_16 = arith.constant dense<0.000000e+00> : vector<128xf32>
    %34 = vector.multi_reduction <add>, %33, %cst_16 [0] : vector<2x128xf32> to vector<128xf32>
    %35 = vector.shape_cast %34 : vector<128xf32> to vector<1x128xf32>
    %36 = arith.addf %31, %35 : vector<1x128xf32>
    %c0_17 = arith.constant 0 : index
    %c0_18 = arith.constant 0 : index
    %c0_19 = arith.constant 0 : index
    %37 = vector.load %arg4[%c0_17, %c0_18, %c0_19] : memref<1x13x128xf32, #tpu.memory_space<vmem>>, vector<1x1x128xf32>
    %38 = vector.shape_cast %37 : vector<1x1x128xf32> to vector<1x128xf32>
    %39 = vector.shape_cast %36 : vector<1x128xf32> to vector<1x1x128xf32>
    tpu.vector_store %arg4[%c0_17, %c0_18, %c0_19], %39 {strides = array<i32>} : memref<1x13x128xf32, #tpu.memory_space<vmem>>, vector<1x1x128xf32>,
    %c0_20 = arith.constant 0 : index
    %c4 = arith.constant 4 : index
    %c0_21 = arith.constant 0 : index
    %40 = vector.load %arg4[%c0_20, %c4, %c0_21] : memref<1x13x128xf32, #tpu.memory_space<vmem>>, vector<1x1x128xf32>
    %41 = vector.shape_cast %40 : vector<1x1x128xf32> to vector<1x128xf32>
    %cst_22 = arith.constant dense<0.000000e+00> : vector<128xf32>
    %42 = vector.multi_reduction <add>, %29, %cst_22 [0] : vector<2x128xf32> to vector<128xf32>
    %43 = vector.shape_cast %42 : vector<128xf32> to vector<1x128xf32>
    %44 = arith.addf %41, %43 : vector<1x128xf32>
    %c0_23 = arith.constant 0 : index
    %c4_24 = arith.constant 4 : index
    %c0_25 = arith.constant 0 : index
    %45 = vector.load %arg4[%c0_23, %c4_24, %c0_25] : memref<1x13x128xf32, #tpu.memory_space<vmem>>, vector<1x1x128xf32>
    %46 = vector.shape_cast %45 : vector<1x1x128xf32> to vector<1x128xf32>
    %47 = vector.shape_cast %44 : vector<1x128xf32> to vector<1x1x128xf32>
    tpu.vector_store %arg4[%c0_23, %c4_24, %c0_25], %47 {strides = array<i32>} : memref<1x13x128xf32, #tpu.memory_space<vmem>>, vector<1x1x128xf32>,
    %c0_26 = arith.constant 0 : index
    %c8 = arith.constant 8 : index
    %c0_27 = arith.constant 0 : index
    %48 = vector.load %arg4[%c0_26, %c8, %c0_27] : memref<1x13x128xf32, #tpu.memory_space<vmem>>, vector<1x1x128xf32>
    %49 = vector.shape_cast %48 : vector<1x1x128xf32> to vector<1x128xf32>
    %50 = arith.extui %27 : vector<2x128xi1> to vector<2x128xi32>
    %51 = arith.sitofp %50 : vector<2x128xi32> to vector<2x128xf32>
    %cst_28 = arith.constant dense<0.000000e+00> : vector<128xf32>
    %52 = vector.multi_reduction <add>, %51, %cst_28 [0] : vector<2x128xf32> to vector<128xf32>
    %53 = vector.shape_cast %52 : vector<128xf32> to vector<1x128xf32>
    %54 = arith.addf %49, %53 : vector<1x128xf32>
    %c0_29 = arith.constant 0 : index
    %c8_30 = arith.constant 8 : index
    %c0_31 = arith.constant 0 : index
    %55 = vector.load %arg4[%c0_29, %c8_30, %c0_31] : memref<1x13x128xf32, #tpu.memory_space<vmem>>, vector<1x1x128xf32>
    %56 = vector.shape_cast %55 : vector<1x1x128xf32> to vector<1x128xf32>
    %57 = vector.shape_cast %54 : vector<1x128xf32> to vector<1x1x128xf32>
    tpu.vector_store %arg4[%c0_29, %c8_30, %c0_31], %57 {strides = array<i32>} : memref<1x13x128xf32, #tpu.memory_space<vmem>>, vector<1x1x128xf32>,
    %58 = vector.extract_strided_slice %4 {offsets = [0, 0, 0], sizes = [1, 2, 128], strides = [1, 1, 1]} : vector<4x2x128xf32> to vector<1x2x128xf32>
    %59 = vector.shape_cast %58 : vector<1x2x128xf32> to vector<2x128xf32>
    %cst_32 = arith.constant 0.000000e+00 : f32
    %60 = vector.broadcast %cst_32 : f32 to vector<2x128xf32>
    %61 = arith.select %27, %59, %60 : vector<2x128xi1>, vector<2x128xf32>
    %cst_33 = arith.constant dense<0.000000e+00> : vector<128xf32>
    %62 = vector.multi_reduction <add>, %61, %cst_33 [0] : vector<2x128xf32> to vector<128xf32>
    %63 = vector.shape_cast %62 : vector<128xf32> to vector<1x128xf32>
    %64 = arith.subf %25, %63 : vector<1x128xf32>
    %c1_i32 = arith.constant 1 : i32
    %65 = vector.broadcast %c1_i32 : i32 to vector<2x128xi32>
    %66 = arith.cmpi eq, %6, %65 : vector<2x128xi32>
    %67 = vector.extract_strided_slice %20 {offsets = [1, 0, 0], sizes = [1, 2, 128], strides = [1, 1, 1]} : vector<4x2x128xf32> to vector<1x2x128xf32>
    %68 = vector.shape_cast %67 : vector<1x2x128xf32> to vector<2x128xf32>
    %c0_34 = arith.constant 0 : index
    %c1 = arith.constant 1 : index
    %c0_35 = arith.constant 0 : index
    %69 = vector.load %arg4[%c0_34, %c1, %c0_35] : memref<1x13x128xf32, #tpu.memory_space<vmem>>, vector<1x1x128xf32>
    %70 = vector.shape_cast %69 : vector<1x1x128xf32> to vector<1x128xf32>
    %cst_36 = arith.constant 0.000000e+00 : f32
    %71 = vector.broadcast %cst_36 : f32 to vector<2x128xf32>
    %72 = arith.select %66, %68, %71 : vector<2x128xi1>, vector<2x128xf32>
    %cst_37 = arith.constant dense<0.000000e+00> : vector<128xf32>
    %73 = vector.multi_reduction <add>, %72, %cst_37 [0] : vector<2x128xf32> to vector<128xf32>
    %74 = vector.shape_cast %73 : vector<128xf32> to vector<1x128xf32>
    %75 = arith.addf %70, %74 : vector<1x128xf32>
    %c0_38 = arith.constant 0 : index
    %c1_39 = arith.constant 1 : index
    %c0_40 = arith.constant 0 : index
    %76 = vector.load %arg4[%c0_38, %c1_39, %c0_40] : memref<1x13x128xf32, #tpu.memory_space<vmem>>, vector<1x1x128xf32>
    %77 = vector.shape_cast %76 : vector<1x1x128xf32> to vector<1x128xf32>
    %78 = vector.shape_cast %75 : vector<1x128xf32> to vector<1x1x128xf32>
    tpu.vector_store %arg4[%c0_38, %c1_39, %c0_40], %78 {strides = array<i32>} : memref<1x13x128xf32, #tpu.memory_space<vmem>>, vector<1x1x128xf32>,
    %c0_41 = arith.constant 0 : index
    %c5 = arith.constant 5 : index
    %c0_42 = arith.constant 0 : index
    %79 = vector.load %arg4[%c0_41, %c5, %c0_42] : memref<1x13x128xf32, #tpu.memory_space<vmem>>, vector<1x1x128xf32>
    %80 = vector.shape_cast %79 : vector<1x1x128xf32> to vector<1x128xf32>
    %cst_43 = arith.constant dense<0.000000e+00> : vector<128xf32>
    %81 = vector.multi_reduction <add>, %68, %cst_43 [0] : vector<2x128xf32> to vector<128xf32>
    %82 = vector.shape_cast %81 : vector<128xf32> to vector<1x128xf32>
    %83 = arith.addf %80, %82 : vector<1x128xf32>
    %c0_44 = arith.constant 0 : index
    %c5_45 = arith.constant 5 : index
    %c0_46 = arith.constant 0 : index
    %84 = vector.load %arg4[%c0_44, %c5_45, %c0_46] : memref<1x13x128xf32, #tpu.memory_space<vmem>>, vector<1x1x128xf32>
    %85 = vector.shape_cast %84 : vector<1x1x128xf32> to vector<1x128xf32>
    %86 = vector.shape_cast %83 : vector<1x128xf32> to vector<1x1x128xf32>
    tpu.vector_store %arg4[%c0_44, %c5_45, %c0_46], %86 {strides = array<i32>} : memref<1x13x128xf32, #tpu.memory_space<vmem>>, vector<1x1x128xf32>,
    %c0_47 = arith.constant 0 : index
    %c9 = arith.constant 9 : index
    %c0_48 = arith.constant 0 : index
    %87 = vector.load %arg4[%c0_47, %c9, %c0_48] : memref<1x13x128xf32, #tpu.memory_space<vmem>>, vector<1x1x128xf32>
    %88 = vector.shape_cast %87 : vector<1x1x128xf32> to vector<1x128xf32>
    %89 = arith.extui %66 : vector<2x128xi1> to vector<2x128xi32>
    %90 = arith.sitofp %89 : vector<2x128xi32> to vector<2x128xf32>
    %cst_49 = arith.constant dense<0.000000e+00> : vector<128xf32>
    %91 = vector.multi_reduction <add>, %90, %cst_49 [0] : vector<2x128xf32> to vector<128xf32>
    %92 = vector.shape_cast %91 : vector<128xf32> to vector<1x128xf32>
    %93 = arith.addf %88, %92 : vector<1x128xf32>
    %c0_50 = arith.constant 0 : index
    %c9_51 = arith.constant 9 : index
    %c0_52 = arith.constant 0 : index
    %94 = vector.load %arg4[%c0_50, %c9_51, %c0_52] : memref<1x13x128xf32, #tpu.memory_space<vmem>>, vector<1x1x128xf32>
    %95 = vector.shape_cast %94 : vector<1x1x128xf32> to vector<1x128xf32>
    %96 = vector.shape_cast %93 : vector<1x128xf32> to vector<1x1x128xf32>
    tpu.vector_store %arg4[%c0_50, %c9_51, %c0_52], %96 {strides = array<i32>} : memref<1x13x128xf32, #tpu.memory_space<vmem>>, vector<1x1x128xf32>,
    %97 = vector.extract_strided_slice %4 {offsets = [1, 0, 0], sizes = [1, 2, 128], strides = [1, 1, 1]} : vector<4x2x128xf32> to vector<1x2x128xf32>
    %98 = vector.shape_cast %97 : vector<1x2x128xf32> to vector<2x128xf32>
    %cst_53 = arith.constant 0.000000e+00 : f32
    %99 = vector.broadcast %cst_53 : f32 to vector<2x128xf32>
    %100 = arith.select %66, %98, %99 : vector<2x128xi1>, vector<2x128xf32>
    %cst_54 = arith.constant dense<0.000000e+00> : vector<128xf32>
    %101 = vector.multi_reduction <add>, %100, %cst_54 [0] : vector<2x128xf32> to vector<128xf32>
    %102 = vector.shape_cast %101 : vector<128xf32> to vector<1x128xf32>
    %103 = arith.subf %64, %102 : vector<1x128xf32>
    %c2_i32 = arith.constant 2 : i32
    %104 = vector.broadcast %c2_i32 : i32 to vector<2x128xi32>
    %105 = arith.cmpi eq, %6, %104 : vector<2x128xi32>
    %106 = vector.extract_strided_slice %20 {offsets = [2, 0, 0], sizes = [1, 2, 128], strides = [1, 1, 1]} : vector<4x2x128xf32> to vector<1x2x128xf32>
    %107 = vector.shape_cast %106 : vector<1x2x128xf32> to vector<2x128xf32>
    %c0_55 = arith.constant 0 : index
    %c2 = arith.constant 2 : index
    %c0_56 = arith.constant 0 : index
    %108 = vector.load %arg4[%c0_55, %c2, %c0_56] : memref<1x13x128xf32, #tpu.memory_space<vmem>>, vector<1x1x128xf32>
    %109 = vector.shape_cast %108 : vector<1x1x128xf32> to vector<1x128xf32>
    %cst_57 = arith.constant 0.000000e+00 : f32
    %110 = vector.broadcast %cst_57 : f32 to vector<2x128xf32>
    %111 = arith.select %105, %107, %110 : vector<2x128xi1>, vector<2x128xf32>
    %cst_58 = arith.constant dense<0.000000e+00> : vector<128xf32>
    %112 = vector.multi_reduction <add>, %111, %cst_58 [0] : vector<2x128xf32> to vector<128xf32>
    %113 = vector.shape_cast %112 : vector<128xf32> to vector<1x128xf32>
    %114 = arith.addf %109, %113 : vector<1x128xf32>
    %c0_59 = arith.constant 0 : index
    %c2_60 = arith.constant 2 : index
    %c0_61 = arith.constant 0 : index
    %115 = vector.load %arg4[%c0_59, %c2_60, %c0_61] : memref<1x13x128xf32, #tpu.memory_space<vmem>>, vector<1x1x128xf32>
    %116 = vector.shape_cast %115 : vector<1x1x128xf32> to vector<1x128xf32>
    %117 = vector.shape_cast %114 : vector<1x128xf32> to vector<1x1x128xf32>
    tpu.vector_store %arg4[%c0_59, %c2_60, %c0_61], %117 {strides = array<i32>} : memref<1x13x128xf32, #tpu.memory_space<vmem>>, vector<1x1x128xf32>,
    %c0_62 = arith.constant 0 : index
    %c6 = arith.constant 6 : index
    %c0_63 = arith.constant 0 : index
    %118 = vector.load %arg4[%c0_62, %c6, %c0_63] : memref<1x13x128xf32, #tpu.memory_space<vmem>>, vector<1x1x128xf32>
    %119 = vector.shape_cast %118 : vector<1x1x128xf32> to vector<1x128xf32>
    %cst_64 = arith.constant dense<0.000000e+00> : vector<128xf32>
    %120 = vector.multi_reduction <add>, %107, %cst_64 [0] : vector<2x128xf32> to vector<128xf32>
    %121 = vector.shape_cast %120 : vector<128xf32> to vector<1x128xf32>
    %122 = arith.addf %119, %121 : vector<1x128xf32>
    %c0_65 = arith.constant 0 : index
    %c6_66 = arith.constant 6 : index
    %c0_67 = arith.constant 0 : index
    %123 = vector.load %arg4[%c0_65, %c6_66, %c0_67] : memref<1x13x128xf32, #tpu.memory_space<vmem>>, vector<1x1x128xf32>
    %124 = vector.shape_cast %123 : vector<1x1x128xf32> to vector<1x128xf32>
    %125 = vector.shape_cast %122 : vector<1x128xf32> to vector<1x1x128xf32>
    tpu.vector_store %arg4[%c0_65, %c6_66, %c0_67], %125 {strides = array<i32>} : memref<1x13x128xf32, #tpu.memory_space<vmem>>, vector<1x1x128xf32>,
    %c0_68 = arith.constant 0 : index
    %c10 = arith.constant 10 : index
    %c0_69 = arith.constant 0 : index
    %126 = vector.load %arg4[%c0_68, %c10, %c0_69] : memref<1x13x128xf32, #tpu.memory_space<vmem>>, vector<1x1x128xf32>
    %127 = vector.shape_cast %126 : vector<1x1x128xf32> to vector<1x128xf32>
    %128 = arith.extui %105 : vector<2x128xi1> to vector<2x128xi32>
    %129 = arith.sitofp %128 : vector<2x128xi32> to vector<2x128xf32>
    %cst_70 = arith.constant dense<0.000000e+00> : vector<128xf32>
    %130 = vector.multi_reduction <add>, %129, %cst_70 [0] : vector<2x128xf32> to vector<128xf32>
    %131 = vector.shape_cast %130 : vector<128xf32> to vector<1x128xf32>
    %132 = arith.addf %127, %131 : vector<1x128xf32>
    %c0_71 = arith.constant 0 : index
    %c10_72 = arith.constant 10 : index
    %c0_73 = arith.constant 0 : index
    %133 = vector.load %arg4[%c0_71, %c10_72, %c0_73] : memref<1x13x128xf32, #tpu.memory_space<vmem>>, vector<1x1x128xf32>
    %134 = vector.shape_cast %133 : vector<1x1x128xf32> to vector<1x128xf32>
    %135 = vector.shape_cast %132 : vector<1x128xf32> to vector<1x1x128xf32>
    tpu.vector_store %arg4[%c0_71, %c10_72, %c0_73], %135 {strides = array<i32>} : memref<1x13x128xf32, #tpu.memory_space<vmem>>, vector<1x1x128xf32>,
    %136 = vector.extract_strided_slice %4 {offsets = [2, 0, 0], sizes = [1, 2, 128], strides = [1, 1, 1]} : vector<4x2x128xf32> to vector<1x2x128xf32>
    %137 = vector.shape_cast %136 : vector<1x2x128xf32> to vector<2x128xf32>
    %cst_74 = arith.constant 0.000000e+00 : f32
    %138 = vector.broadcast %cst_74 : f32 to vector<2x128xf32>
    %139 = arith.select %105, %137, %138 : vector<2x128xi1>, vector<2x128xf32>
    %cst_75 = arith.constant dense<0.000000e+00> : vector<128xf32>
    %140 = vector.multi_reduction <add>, %139, %cst_75 [0] : vector<2x128xf32> to vector<128xf32>
    %141 = vector.shape_cast %140 : vector<128xf32> to vector<1x128xf32>
    %142 = arith.subf %103, %141 : vector<1x128xf32>
    %c3_i32 = arith.constant 3 : i32
    %143 = vector.broadcast %c3_i32 : i32 to vector<2x128xi32>
    %144 = arith.cmpi eq, %6, %143 : vector<2x128xi32>
    %145 = vector.extract_strided_slice %20 {offsets = [3, 0, 0], sizes = [1, 2, 128], strides = [1, 1, 1]} : vector<4x2x128xf32> to vector<1x2x128xf32>
    %146 = vector.shape_cast %145 : vector<1x2x128xf32> to vector<2x128xf32>
    %c0_76 = arith.constant 0 : index
    %c3 = arith.constant 3 : index
    %c0_77 = arith.constant 0 : index
    %147 = vector.load %arg4[%c0_76, %c3, %c0_77] : memref<1x13x128xf32, #tpu.memory_space<vmem>>, vector<1x1x128xf32>
    %148 = vector.shape_cast %147 : vector<1x1x128xf32> to vector<1x128xf32>
    %cst_78 = arith.constant 0.000000e+00 : f32
    %149 = vector.broadcast %cst_78 : f32 to vector<2x128xf32>
    %150 = arith.select %144, %146, %149 : vector<2x128xi1>, vector<2x128xf32>
    %cst_79 = arith.constant dense<0.000000e+00> : vector<128xf32>
    %151 = vector.multi_reduction <add>, %150, %cst_79 [0] : vector<2x128xf32> to vector<128xf32>
    %152 = vector.shape_cast %151 : vector<128xf32> to vector<1x128xf32>
    %153 = arith.addf %148, %152 : vector<1x128xf32>
    %c0_80 = arith.constant 0 : index
    %c3_81 = arith.constant 3 : index
    %c0_82 = arith.constant 0 : index
    %154 = vector.load %arg4[%c0_80, %c3_81, %c0_82] : memref<1x13x128xf32, #tpu.memory_space<vmem>>, vector<1x1x128xf32>
    %155 = vector.shape_cast %154 : vector<1x1x128xf32> to vector<1x128xf32>
    %156 = vector.shape_cast %153 : vector<1x128xf32> to vector<1x1x128xf32>
    tpu.vector_store %arg4[%c0_80, %c3_81, %c0_82], %156 {strides = array<i32>} : memref<1x13x128xf32, #tpu.memory_space<vmem>>, vector<1x1x128xf32>,
    %c0_83 = arith.constant 0 : index
    %c7 = arith.constant 7 : index
    %c0_84 = arith.constant 0 : index
    %157 = vector.load %arg4[%c0_83, %c7, %c0_84] : memref<1x13x128xf32, #tpu.memory_space<vmem>>, vector<1x1x128xf32>
    %158 = vector.shape_cast %157 : vector<1x1x128xf32> to vector<1x128xf32>
    %cst_85 = arith.constant dense<0.000000e+00> : vector<128xf32>
    %159 = vector.multi_reduction <add>, %146, %cst_85 [0] : vector<2x128xf32> to vector<128xf32>
    %160 = vector.shape_cast %159 : vector<128xf32> to vector<1x128xf32>
    %161 = arith.addf %158, %160 : vector<1x128xf32>
    %c0_86 = arith.constant 0 : index
    %c7_87 = arith.constant 7 : index
    %c0_88 = arith.constant 0 : index
    %162 = vector.load %arg4[%c0_86, %c7_87, %c0_88] : memref<1x13x128xf32, #tpu.memory_space<vmem>>, vector<1x1x128xf32>
    %163 = vector.shape_cast %162 : vector<1x1x128xf32> to vector<1x128xf32>
    %164 = vector.shape_cast %161 : vector<1x128xf32> to vector<1x1x128xf32>
    tpu.vector_store %arg4[%c0_86, %c7_87, %c0_88], %164 {strides = array<i32>} : memref<1x13x128xf32, #tpu.memory_space<vmem>>, vector<1x1x128xf32>,
    %c0_89 = arith.constant 0 : index
    %c11 = arith.constant 11 : index
    %c0_90 = arith.constant 0 : index
    %165 = vector.load %arg4[%c0_89, %c11, %c0_90] : memref<1x13x128xf32, #tpu.memory_space<vmem>>, vector<1x1x128xf32>
    %166 = vector.shape_cast %165 : vector<1x1x128xf32> to vector<1x128xf32>
    %167 = arith.extui %144 : vector<2x128xi1> to vector<2x128xi32>
    %168 = arith.sitofp %167 : vector<2x128xi32> to vector<2x128xf32>
    %cst_91 = arith.constant dense<0.000000e+00> : vector<128xf32>
    %169 = vector.multi_reduction <add>, %168, %cst_91 [0] : vector<2x128xf32> to vector<128xf32>
    %170 = vector.shape_cast %169 : vector<128xf32> to vector<1x128xf32>
    %171 = arith.addf %166, %170 : vector<1x128xf32>
    %c0_92 = arith.constant 0 : index
    %c11_93 = arith.constant 11 : index
    %c0_94 = arith.constant 0 : index
    %172 = vector.load %arg4[%c0_92, %c11_93, %c0_94] : memref<1x13x128xf32, #tpu.memory_space<vmem>>, vector<1x1x128xf32>
    %173 = vector.shape_cast %172 : vector<1x1x128xf32> to vector<1x128xf32>
    %174 = vector.shape_cast %171 : vector<1x128xf32> to vector<1x1x128xf32>
    tpu.vector_store %arg4[%c0_92, %c11_93, %c0_94], %174 {strides = array<i32>} : memref<1x13x128xf32, #tpu.memory_space<vmem>>, vector<1x1x128xf32>,
    %175 = vector.extract_strided_slice %4 {offsets = [3, 0, 0], sizes = [1, 2, 128], strides = [1, 1, 1]} : vector<4x2x128xf32> to vector<1x2x128xf32>
    %176 = vector.shape_cast %175 : vector<1x2x128xf32> to vector<2x128xf32>
    %cst_95 = arith.constant 0.000000e+00 : f32
    %177 = vector.broadcast %cst_95 : f32 to vector<2x128xf32>
    %178 = arith.select %144, %176, %177 : vector<2x128xi1>, vector<2x128xf32>
    %cst_96 = arith.constant dense<0.000000e+00> : vector<128xf32>
    %179 = vector.multi_reduction <add>, %178, %cst_96 [0] : vector<2x128xf32> to vector<128xf32>
    %180 = vector.shape_cast %179 : vector<128xf32> to vector<1x128xf32>
    %181 = arith.subf %142, %180 : vector<1x128xf32>
    %c0_97 = arith.constant 0 : index
    %c12 = arith.constant 12 : index
    %c0_98 = arith.constant 0 : index
    %182 = vector.load %arg4[%c0_97, %c12, %c0_98] : memref<1x13x128xf32, #tpu.memory_space<vmem>>, vector<1x1x128xf32>
    %183 = vector.shape_cast %182 : vector<1x1x128xf32> to vector<1x128xf32>
    %184 = arith.addf %183, %181 : vector<1x128xf32>
    %c0_99 = arith.constant 0 : index
    %c12_100 = arith.constant 12 : index
    %c0_101 = arith.constant 0 : index
    %185 = vector.load %arg4[%c0_99, %c12_100, %c0_101] : memref<1x13x128xf32, #tpu.memory_space<vmem>>, vector<1x1x128xf32>
    %186 = vector.shape_cast %185 : vector<1x1x128xf32> to vector<1x128xf32>
    %187 = vector.shape_cast %184 : vector<1x128xf32> to vector<1x1x128xf32>
    tpu.vector_store %arg4[%c0_99, %c12_100, %c0_101], %187 {strides = array<i32>} : memref<1x13x128xf32, #tpu.memory_space<vmem>>, vector<1x1x128xf32>,
    return
  }
  func.func @transform_0(%arg0: i32, %arg1: i32) -> (i32, i32, i32, i32) {
    %c0_i32 = arith.constant 0 : i32
    %c0_i32_0 = arith.constant 0 : i32
    %c0_i32_1 = arith.constant 0 : i32
    return %arg0, %c0_i32, %arg1, %c0_i32_0 : i32, i32, i32, i32
  }
  func.func @transform_1(%arg0: i32, %arg1: i32) -> (i32, i32, i32, i32) {
    %c0_i32 = arith.constant 0 : i32
    %c0_i32_0 = arith.constant 0 : i32
    %c0_i32_1 = arith.constant 0 : i32
    return %arg0, %c0_i32, %arg1, %c0_i32_0 : i32, i32, i32, i32
  }
  func.func @transform_2(%arg0: i32, %arg1: i32) -> (i32, i32, i32) {
    %c0_i32 = arith.constant 0 : i32
    %c0_i32_0 = arith.constant 0 : i32
    %c0_i32_1 = arith.constant 0 : i32
    return %arg0, %c0_i32, %c0_i32_0 : i32, i32, i32
  }
}

</mosaic_0001>

<llo_original>
// kernel: tpu_custom_call.1
$region0: #{tpu_custom_call.1}
  #allocation0 [shape = 'u32[]', space=smem, size = 0x4, offset = 0x4, fixed_abs, tag = 'smem constant byte address 0x4 - core index']
  #allocation1 [shape = 'u32[144,128]{1,0:T(1,128)}', space=vmem, size = 0x12000, scoped, tag = 'internal scratch']
  %s0 = inlined_call_operand.hbm [shape: f32[2,4,2,128], index: 0, kind: input, shape index: {}]
  %s1 = inlined_call_operand.hbm [shape: s32[2,1,2,128], index: 1, kind: input, shape index: {}]
  %s2 = inlined_call_operand.vmem [shape: f32[2,13,128], index: 2, kind: output, shape index: {}]
  %s3 = sld [smem:[#allocation0]]
  $region53: #{tpu_custom_call.1} parent=0
    _
  %s5 = ssub.s32 1, %s3
  %s6 = scalar_select 0, %s5, %s3
  $region1: #{tpu_custom_call.1} parent=0
    #allocation2 [shape = 'u8[8192]{0}', space=vmem, size = 0x2000, scoped, tag = 'input window, operand 0']
    #allocation3 [shape = 's32[2]{0}', space=sflag, size = 0x8, scoped, tag = 'scoped memory for tpu_custom_call.1']
    #allocation4 [shape = 'u8[2048]{0}', space=vmem, size = 0x800, scoped, tag = 'input window, operand 1']
    #allocation5 [shape = 's32[2]{0}', space=sflag, size = 0x8, scoped, tag = 'scoped memory for tpu_custom_call.1']
    %7 = vsyncpa [#allocation3], 0
    %s8 = scalar_lea.sflag [#allocation3], 1
    %9 = vsyncpa %s8, 0
    %10 = vsyncpa [#allocation5], 0
    %s11 = scalar_lea.sflag [#allocation5], 1
    %12 = vsyncpa %s11, 0
    loop: start=0, step=1, limit=4
    $region2: #{tpu_custom_call.1} parent=1 // loop_pre_header
      _
    $region3: #{tpu_custom_call.1} parent=1 // loop_header
      %s14 = sphi 0, %s18
      %p15 = scmp.ge.s32.totalorder %s14, 4
      %s21 = sphi 0, %s33
      %s22 = sphi 0, %s29
      %s23 = sphi 0, %s21
      %s24 = sphi 0, %s22
      %s25 = sphi 0, %s23
      %s26 = sphi 0, %s24
      %s38 = sphi 0, %s40
      %s41 = sphi 0, %s38
      %s42 = sphi 0, %s41
      %s58 = sphi 0, %s42
      %s66 = sphi 0, %s68
      %s69 = sphi 0, %s66
      %s70 = sphi 0, %s69
      %s86 = sphi 0, %s70
      %s92 = sphi 0, %s94
      %s95 = sphi 0, %s92
      %s96 = sphi 0, %s95
      %s112 = sphi 0, %s96
    $region4: #{tpu_custom_call.1} parent=1 // loop_header_branch
      %17 = sbr.rel (%p15) target = $region8
    $region5: #{tpu_custom_call.1} parent=1 // loop_body
      %s19 = ssub.s32 %s14, 1
      %s20 = ssub.s32 %s14, 2
      %s27 = sadd.s32 1, %s22
      %p28 = scmp.ge.s32.totalorder %s27, 1
      %s29 = scalar_select %p28, 0, %s27
      %s30 = sadd.s32 1, %s21
      %s31 = scalar_select %p28, %s30, %s21
      %p32 = scmp.ge.s32.totalorder %s31, 2
      %s33 = scalar_select %p32, 0, %s31
      %s34 = ssub.s32 %s21, %s33
      %s35 = ssub.s32 %s22, %s29
      %s36 = sor.u32 %s34, %s35
      %p37 = scmp.eq.s32.totalorder %s36, 0
      %s39 = sadd.s32 %s38, 1
      %s40 = scalar_select %p37, %s38, %s39
      %p43 = pneg %p37
      %p44 = scmp.eq.s32.totalorder %s14, 1
      %p45 = por %p43, %p44
      %p46 = scmp.ne.s32.totalorder %s38, %s41
      %p47 = scmp.eq.s32.totalorder %s14, 0
      %p48 = por %p46, %p47
      %p49 = scmp.ne.s32.totalorder %s38, %s41
      %p50 = scmp.eq.s32.totalorder %s19, 1
      %p51 = por %p49, %p50
      %p52 = scmp.ne.s32.totalorder %s41, %s42
      %p53 = scmp.eq.s32.totalorder %s19, 0
      %p54 = por %p52, %p53
      %p55 = scmp.ne.s32.totalorder %s41, %s42
      %p56 = scmp.eq.s32.totalorder %s20, 1
      %p57 = por %p55, %p56
      %p59 = scmp.ne.s32.totalorder %s42, %s58
      %p60 = scmp.eq.s32.totalorder %s20, 0
      %p61 = por %p59, %p60
      %s62 = ssub.s32 %s21, %s33
      %s63 = ssub.s32 %s22, %s29
      %s64 = sor.u32 %s62, %s63
      %p65 = scmp.eq.s32.totalorder %s64, 0
      %s67 = sadd.s32 %s66, 1
      %s68 = scalar_select %p65, %s66, %s67
      %p71 = pneg %p65
      %p72 = scmp.eq.s32.totalorder %s14, 1
      %p73 = por %p71, %p72
      %p74 = scmp.ne.s32.totalorder %s66, %s69
      %p75 = scmp.eq.s32.totalorder %s14, 0
      %p76 = por %p74, %p75
      %p77 = scmp.ne.s32.totalorder %s66, %s69
      %p78 = scmp.eq.s32.totalorder %s19, 1
      %p79 = por %p77, %p78
      %p80 = scmp.ne.s32.totalorder %s69, %s70
      %p81 = scmp.eq.s32.totalorder %s19, 0
      %p82 = por %p80, %p81
      %p83 = scmp.ne.s32.totalorder %s69, %s70
      %p84 = scmp.eq.s32.totalorder %s20, 1
      %p85 = por %p83, %p84
      %p87 = scmp.ne.s32.totalorder %s70, %s86
      %p88 = scmp.eq.s32.totalorder %s20, 0
      %p89 = por %p87, %p88
      %s90 = ssub.s32 %s21, %s33
      %p91 = scmp.eq.s32.totalorder %s90, 0
      %s93 = sadd.s32 %s92, 1
      %s94 = scalar_select %p91, %s92, %s93
      %p97 = pneg %p91
      %p98 = scmp.eq.s32.totalorder %s14, 1
      %p99 = por %p97, %p98
      %p100 = scmp.ne.s32.totalorder %s92, %s95
      %p101 = scmp.eq.s32.totalorder %s14, 0
      %p102 = por %p100, %p101
      %p103 = scmp.ne.s32.totalorder %s92, %s95
      %p104 = scmp.eq.s32.totalorder %s19, 1
      %p105 = por %p103, %p104
      %p106 = scmp.ne.s32.totalorder %s95, %s96
      %p107 = scmp.eq.s32.totalorder %s19, 0
      %p108 = por %p106, %p107
      %p109 = scmp.ne.s32.totalorder %s95, %s96
      %p110 = scmp.eq.s32.totalorder %s20, 1
      %p111 = por %p109, %p110
      %p113 = scmp.ne.s32.totalorder %s96, %s112
      %p114 = scmp.eq.s32.totalorder %s20, 0
      %p115 = por %p113, %p114
      %p116 = scmp.le.s32.totalorder 1, %s14
      %p117 = scmp.lt.s32.totalorder %s14, 3
      %p118 = pnand %p116, %p117
      %p119 = pneg %p118
      // Predicated region
      $region9: #{tpu_custom_call.1} parent=5 // pred_check
        _
      $region10: #{tpu_custom_call.1} parent=5 // pred_check_branch
        %121 = sbr.rel (%p118) target = $region12
      $region11: #{tpu_custom_call.1} parent=5 // pred_region
        %s122 = ssub.s32 %s14, 1
      $region12: #{tpu_custom_call.1} parent=5 // pred_fallthru
        _
      %p123 = scmp.lt.s32.totalorder %s14, 2
      // Predicated region
      $region13: #{tpu_custom_call.1} parent=5 // pred_check
        %p124 = pneg %p123
      $region14: #{tpu_custom_call.1} parent=5 // pred_check_branch
        %126 = sbr.rel (%p124) target = $region16
      $region15: #{tpu_custom_call.1} parent=5 // pred_region
        // Predicated region
        $region17: #{tpu_custom_call.1} parent=15 // pred_check
          %p127 = pneg %p48
        $region18: #{tpu_custom_call.1} parent=15 // pred_check_branch
          %129 = sbr.rel (%p127) target = $region20
        $region19: #{tpu_custom_call.1} parent=15 // pred_region
          %s130 = sand.u32 %s38, 1
          %s131 = scalar_lea.sflag [#allocation3], %s130
          %s132 = sand.u32 %s38, 1
          %s133 = smul.addr %s132, 8
          %s134 = scalar_lea.vmem [#allocation2], %s133
          %s136 = ssub.s32 128, 128
          %137 = vsyncadd %s131, %s136
          %s138 = smul.addr %s21, 4
          %s139 = sadd.s32 %s22, %s138
          %s140 = smul.addr %s139, 32
          %s141 = scalar_lea.hbm %s0, %s140
          %s142 = sshll.u32 %s134, 4
          %s143 = int_to_ptr.vmem [resolvable:$true] %s142
          %148 = dma.hbm_to_vmem [thread:$0]  %s141, 128, %s143, %s131, 32, 32, 2
        $region20: #{tpu_custom_call.1} parent=15 // pred_fallthru
          _
        // Predicated region
        $region21: #{tpu_custom_call.1} parent=15 // pred_check
          %p149 = pneg %p76
        $region22: #{tpu_custom_call.1} parent=15 // pred_check_branch
          %151 = sbr.rel (%p149) target = $region24
        $region23: #{tpu_custom_call.1} parent=15 // pred_region
          %s152 = sand.u32 %s66, 1
          %s153 = scalar_lea.sflag [#allocation5], %s152
          %s154 = sand.u32 %s66, 1
          %s155 = smul.addr %s154, 2
          %s156 = scalar_lea.vmem [#allocation4], %s155
          %s158 = ssub.s32 32, 32
          %159 = vsyncadd %s153, %s158
          %s160 = sadd.s32 %s22, %s21
          %s161 = smul.addr %s160, 32
          %s162 = scalar_lea.hbm %s1, %s161
          %s164 = sshll.u32 %s156, 4
          %s165 = int_to_ptr.vmem [resolvable:$true] %s164
          %167 = dma.hbm_to_vmem [thread:$0]  %s162, 32, %s165, %s153
        $region24: #{tpu_custom_call.1} parent=15 // pred_fallthru
          _
      $region16: #{tpu_custom_call.1} parent=5 // pred_fallthru
        _
      %p168 = scmp.le.s32.totalorder 1, %s14
      %p169 = scmp.lt.s32.totalorder %s14, 3
      %p170 = pnand %p168, %p169
      %p171 = pneg %p170
      // Predicated region
      $region25: #{tpu_custom_call.1} parent=5 // pred_check
        _
      $region26: #{tpu_custom_call.1} parent=5 // pred_check_branch
        %173 = sbr.rel (%p170) target = $region28
      $region27: #{tpu_custom_call.1} parent=5 // pred_region
        %s174 = ssub.s32 %s14, 1
        %s175 = sand.u32 %s41, 1
        %s176 = scalar_lea.sflag [#allocation3], %s175
        %s177 = sand.u32 %s41, 1
        %s178 = smul.addr %s177, 8
        %s179 = scalar_lea.vmem [#allocation2], %s178
        // Predicated region
        $region29: #{tpu_custom_call.1} parent=27 // pred_check
          %p180 = pneg %p54
        $region30: #{tpu_custom_call.1} parent=27 // pred_check_branch
          %182 = sbr.rel (%p180) target = $region32
        $region31: #{tpu_custom_call.1} parent=27 // pred_region
          %183 = dma.done %s176, 128
        $region32: #{tpu_custom_call.1} parent=27 // pred_fallthru
          _
        %s184 = sand.u32 %s69, 1
        %s185 = scalar_lea.sflag [#allocation5], %s184
        %s186 = sand.u32 %s69, 1
        %s187 = smul.addr %s186, 2
        %s188 = scalar_lea.vmem [#allocation4], %s187
        // Predicated region
        $region33: #{tpu_custom_call.1} parent=27 // pred_check
          %p189 = pneg %p82
        $region34: #{tpu_custom_call.1} parent=27 // pred_check_branch
          %191 = sbr.rel (%p189) target = $region36
        $region35: #{tpu_custom_call.1} parent=27 // pred_region
          %192 = dma.done %s185, 32
        $region36: #{tpu_custom_call.1} parent=27 // pred_fallthru
          _
        %s193 = sand.u32 %s41, 1
        %s194 = scalar_lea.sflag [#allocation3], %s193
        %s195 = sand.u32 %s41, 1
        %s196 = smul.addr %s195, 8
        %s197 = scalar_lea.vmem [#allocation2], %s196
        %p198 = pneg %p54
        %p199 = pneg %p51
        %s200 = sand.u32 %s69, 1
        %s201 = scalar_lea.sflag [#allocation5], %s200
        %s202 = sand.u32 %s69, 1
        %s203 = smul.addr %s202, 2
        %s204 = scalar_lea.vmem [#allocation4], %s203
        %p205 = pneg %p82
        %p206 = pneg %p79
        %p207 = pneg %p108
        %p208 = pneg %p105
        %p209 = scmp.lt.s32.totalorder %s23, 1
        %s210 = scalar_select %p209, %s23, 1
        %s211 = smul.addr %s210, 2
        %s212 = smul.addr %s211, 8
        %s213 = scalar_lea.vmem %s2, %s212
        %p214 = scmp.lt.s32.totalorder %s23, 1
        %s215 = scalar_select %p214, %s23, 1
        %s216 = smul.addr %s215, 2
        %s217 = smul.addr %s216, 8
        %s218 = scalar_lea.vmem %s2, %s217
        %p219 = scmp.eq.s32.totalorder %s24, 0
        // Predicated region
        $region37: #{tpu_custom_call.1} parent=27 // pred_check
          %p220 = pneg %p219
        $region38: #{tpu_custom_call.1} parent=27 // pred_check_branch
          %222 = sbr.rel (%p220) target = $region40
        $region39: #{tpu_custom_call.1} parent=27 // pred_region
          %223 = vst [vmem:[%s218] sm:$0xff] 0.0
          %224 = vst [vmem:[%s218 + $0x8] sm:$0x1f] 0.0
        $region40: #{tpu_custom_call.1} parent=27 // pred_fallthru
          _
        %v225 = vld [vmem:[%s179] sm:$0x3]
        %v226 = vld [vmem:[%s179 + $0x2] sm:$0x3]
        %v227 = vld [vmem:[%s179 + $0x4] sm:$0x3]
        %v228 = vld [vmem:[%s179 + $0x6] sm:$0x3]
        %v229 = vld [vmem:[%s188] sm:$0x3]
        %vm230 = vcmask 1041408
        %v231 = vsel %vm230, %v225, -inf
        %v232 = vsel %vm230, %v226, -inf
        %v233 = vsel %vm230, %v227, -inf
        %v234 = vsel %vm230, %v228, -inf
        %v235 = vmax.f32 %v231, %v232
        %v236 = vmax.f32 %v233, %v234
        %v237 = vmax.f32 %v235, %v236
        %v238 = vsub.f32 %v225, %v237
        %v239 = vsub.f32 %v226, %v237
        %v240 = vsub.f32 %v227, %v237
        %v241 = vsub.f32 %v228, %v237
        %v242 = vmul.f32 %v238, 1.442695
        %v243 = vpow.pop %v242
        %v244 = vmul.f32 %v239, 1.442695
        %v245 = vpow.pop %v244
        %v246 = vmul.f32 %v240, 1.442695
        %v247 = vpow.pop %v246
        %v248 = vmul.f32 %v241, 1.442695
        %v249 = vpow.pop %v248
        %v250 = vsel %vm230, %v243, 0.0
        %v251 = vsel %vm230, %v245, 0.0
        %v252 = vadd.f32 %v250, %v251
        %v253 = vsel %vm230, %v247, 0.0
        %v254 = vadd.f32 %v252, %v253
        %v255 = vsel %vm230, %v249, 0.0
        %v256 = vadd.f32 %v254, %v255
        %v257 = vrcp.pop %v256
        %v258 = vmul.f32 %v256, %v257
        %v259 = vsub.f32 2.0, %v258
        %v260 = vmul.f32 %v257, %v259
        %v261 = vmul.f32 %v243, %v260
        %v262 = vmul.f32 %v245, %v260
        %v263 = vmul.f32 %v247, %v260
        %v264 = vmul.f32 %v249, %v260
        %v265 = vlog2.pop %v256
        %v266 = vmul.f32 %v265, 0.6931472
        %v267 = vadd.f32 %v237, %v266
        %v268 = vsel %vm230, %v267, 0.0
        %v269 = vrot.slane %v268, 4
        %v270 = vadd.f32 %v268, %v269
        %v271 = vrot.slane %v270, 2
        %v272 = vadd.f32 %v270, %v271
        %v273 = vrot.slane %v272, 1
        %v274 = vadd.f32 %v272, %v273
        %vm275 = vcmp.eq.s32.totalorder %v229, 0
        %v276 = vld [vmem:[%s218] sm:$0x1]
        %v277 = vsel %vm275, %v261, 0.0
        %v278 = vsel %vm230, %v277, 0.0
        %v279 = vrot.slane %v278, 4
        %v280 = vadd.f32 %v278, %v279
        %v281 = vrot.slane %v280, 2
        %v282 = vadd.f32 %v280, %v281
        %v283 = vrot.slane %v282, 1
        %v284 = vadd.f32 %v282, %v283
        %v285 = vadd.f32 %v276, %v284
        %286 = vst [vmem:[%s218] sm:$0x1] %v285
        %v287 = vld [vmem:[%s218 + $0x4] sm:$0x1]
        %v288 = vsel %vm230, %v261, 0.0
        %v289 = vrot.slane %v288, 4
        %v290 = vadd.f32 %v288, %v289
        %v291 = vrot.slane %v290, 2
        %v292 = vadd.f32 %v290, %v291
        %v293 = vrot.slane %v292, 1
        %v294 = vadd.f32 %v292, %v293
        %v295 = vadd.f32 %v287, %v294
        %296 = vst [vmem:[%s218 + $0x4] sm:$0x1] %v295
        %v297 = vld [vmem:[%s218 + $0x8] sm:$0x1]
        %v298 = vsel %vm275, 1, 0
        %v299 = vcvt.s32.f32 %v298
        %v300 = vsel %vm230, %v299, 0.0
        %v301 = vrot.slane %v300, 4
        %v302 = vadd.f32 %v300, %v301
        %v303 = vrot.slane %v302, 2
        %v304 = vadd.f32 %v302, %v303
        %v305 = vrot.slane %v304, 1
        %v306 = vadd.f32 %v304, %v305
        %v307 = vadd.f32 %v297, %v306
        %308 = vst [vmem:[%s218 + $0x8] sm:$0x1] %v307
        %v309 = vsel %vm275, %v225, 0.0
        %v310 = vsel %vm230, %v309, 0.0
        %v311 = vrot.slane %v310, 4
        %v312 = vadd.f32 %v310, %v311
        %v313 = vrot.slane %v312, 2
        %v314 = vadd.f32 %v312, %v313
        %v315 = vrot.slane %v314, 1
        %v316 = vadd.f32 %v314, %v315
        %v317 = vsub.f32 %v274, %v316
        %vm318 = vcmp.eq.s32.totalorder %v229, 1
        %v319 = vld [vmem:[%s218 + $0x1] sm:$0x1]
        %v320 = vsel %vm318, %v262, 0.0
        %v321 = vsel %vm230, %v320, 0.0
        %v322 = vrot.slane %v321, 4
        %v323 = vadd.f32 %v321, %v322
        %v324 = vrot.slane %v323, 2
        %v325 = vadd.f32 %v323, %v324
        %v326 = vrot.slane %v325, 1
        %v327 = vadd.f32 %v325, %v326
        %v328 = vadd.f32 %v319, %v327
        %329 = vst [vmem:[%s218 + $0x1] sm:$0x1] %v328
        %v330 = vld [vmem:[%s218 + $0x5] sm:$0x1]
        %v331 = vsel %vm230, %v262, 0.0
        %v332 = vrot.slane %v331, 4
        %v333 = vadd.f32 %v331, %v332
        %v334 = vrot.slane %v333, 2
        %v335 = vadd.f32 %v333, %v334
        %v336 = vrot.slane %v335, 1
        %v337 = vadd.f32 %v335, %v336
        %v338 = vadd.f32 %v330, %v337
        %339 = vst [vmem:[%s218 + $0x5] sm:$0x1] %v338
        %v340 = vld [vmem:[%s218 + $0x9] sm:$0x1]
        %v341 = vsel %vm318, 1, 0
        %v342 = vcvt.s32.f32 %v341
        %v343 = vsel %vm230, %v342, 0.0
        %v344 = vrot.slane %v343, 4
        %v345 = vadd.f32 %v343, %v344
        %v346 = vrot.slane %v345, 2
        %v347 = vadd.f32 %v345, %v346
        %v348 = vrot.slane %v347, 1
        %v349 = vadd.f32 %v347, %v348
        %v350 = vadd.f32 %v340, %v349
        %351 = vst [vmem:[%s218 + $0x9] sm:$0x1] %v350
        %v352 = vsel %vm318, %v226, 0.0
        %v353 = vsel %vm230, %v352, 0.0
        %v354 = vrot.slane %v353, 4
        %v355 = vadd.f32 %v353, %v354
        %v356 = vrot.slane %v355, 2
        %v357 = vadd.f32 %v355, %v356
        %v358 = vrot.slane %v357, 1
        %v359 = vadd.f32 %v357, %v358
        %v360 = vsub.f32 %v317, %v359
        %vm361 = vcmp.eq.s32.totalorder %v229, 2
        %v362 = vld [vmem:[%s218 + $0x2] sm:$0x1]
        %v363 = vsel %vm361, %v263, 0.0
        %v364 = vsel %vm230, %v363, 0.0
        %v365 = vrot.slane %v364, 4
        %v366 = vadd.f32 %v364, %v365
        %v367 = vrot.slane %v366, 2
        %v368 = vadd.f32 %v366, %v367
        %v369 = vrot.slane %v368, 1
        %v370 = vadd.f32 %v368, %v369
        %v371 = vadd.f32 %v362, %v370
        %372 = vst [vmem:[%s218 + $0x2] sm:$0x1] %v371
        %v373 = vld [vmem:[%s218 + $0x6] sm:$0x1]
        %v374 = vsel %vm230, %v263, 0.0
        %v375 = vrot.slane %v374, 4
        %v376 = vadd.f32 %v374, %v375
        %v377 = vrot.slane %v376, 2
        %v378 = vadd.f32 %v376, %v377
        %v379 = vrot.slane %v378, 1
        %v380 = vadd.f32 %v378, %v379
        %v381 = vadd.f32 %v373, %v380
        %382 = vst [vmem:[%s218 + $0x6] sm:$0x1] %v381
        %v383 = vld [vmem:[%s218 + $0xa] sm:$0x1]
        %v384 = vsel %vm361, 1, 0
        %v385 = vcvt.s32.f32 %v384
        %v386 = vsel %vm230, %v385, 0.0
        %v387 = vrot.slane %v386, 4
        %v388 = vadd.f32 %v386, %v387
        %v389 = vrot.slane %v388, 2
        %v390 = vadd.f32 %v388, %v389
        %v391 = vrot.slane %v390, 1
        %v392 = vadd.f32 %v390, %v391
        %v393 = vadd.f32 %v383, %v392
        %394 = vst [vmem:[%s218 + $0xa] sm:$0x1] %v393
        %v395 = vsel %vm361, %v227, 0.0
        %v396 = vsel %vm230, %v395, 0.0
        %v397 = vrot.slane %v396, 4
        %v398 = vadd.f32 %v396, %v397
        %v399 = vrot.slane %v398, 2
        %v400 = vadd.f32 %v398, %v399
        %v401 = vrot.slane %v400, 1
        %v402 = vadd.f32 %v400, %v401
        %v403 = vsub.f32 %v360, %v402
        %vm404 = vcmp.eq.s32.totalorder %v229, 3
        %v405 = vld [vmem:[%s218 + $0x3] sm:$0x1]
        %v406 = vsel %vm404, %v264, 0.0
        %v407 = vsel %vm230, %v406, 0.0
        %v408 = vrot.slane %v407, 4
        %v409 = vadd.f32 %v407, %v408
        %v410 = vrot.slane %v409, 2
        %v411 = vadd.f32 %v409, %v410
        %v412 = vrot.slane %v411, 1
        %v413 = vadd.f32 %v411, %v412
        %v414 = vadd.f32 %v405, %v413
        %415 = vst [vmem:[%s218 + $0x3] sm:$0x1] %v414
        %v416 = vld [vmem:[%s218 + $0x7] sm:$0x1]
        %v417 = vsel %vm230, %v264, 0.0
        %v418 = vrot.slane %v417, 4
        %v419 = vadd.f32 %v417, %v418
        %v420 = vrot.slane %v419, 2
        %v421 = vadd.f32 %v419, %v420
        %v422 = vrot.slane %v421, 1
        %v423 = vadd.f32 %v421, %v422
        %v424 = vadd.f32 %v416, %v423
        %425 = vst [vmem:[%s218 + $0x7] sm:$0x1] %v424
        %v426 = vld [vmem:[%s218 + $0xb] sm:$0x1]
        %v427 = vsel %vm404, 1, 0
        %v428 = vcvt.s32.f32 %v427
        %v429 = vsel %vm230, %v428, 0.0
        %v430 = vrot.slane %v429, 4
        %v431 = vadd.f32 %v429, %v430
        %v432 = vrot.slane %v431, 2
        %v433 = vadd.f32 %v431, %v432
        %v434 = vrot.slane %v433, 1
        %v435 = vadd.f32 %v433, %v434
        %v436 = vadd.f32 %v426, %v435
        %437 = vst [vmem:[%s218 + $0xb] sm:$0x1] %v436
        %v438 = vsel %vm404, %v228, 0.0
        %v439 = vsel %vm230, %v438, 0.0
        %v440 = vrot.slane %v439, 4
        %v441 = vadd.f32 %v439, %v440
        %v442 = vrot.slane %v441, 2
        %v443 = vadd.f32 %v441, %v442
        %v444 = vrot.slane %v443, 1
        %v445 = vadd.f32 %v443, %v444
        %v446 = vsub.f32 %v403, %v445
        %v447 = vld [vmem:[%s218 + $0xc] sm:$0x1]
        %v448 = vadd.f32 %v447, %v446
        %449 = vst [vmem:[%s218 + $0xc] sm:$0x1] %v448
        %p450 = scmp.lt.s32.totalorder %s23, 1
        %s451 = scalar_select %p450, %s23, 1
        %s452 = smul.addr %s451, 2
        %s453 = smul.addr %s452, 8
        %s454 = scalar_lea.vmem %s2, %s453
        // Predicated region
        $region41: #{tpu_custom_call.1} parent=27 // pred_check
          %p455 = pneg %p105
        $region42: #{tpu_custom_call.1} parent=27 // pred_check_branch
          %457 = sbr.rel (%p455) target = $region44
        $region43: #{tpu_custom_call.1} parent=27 // pred_region
          _
        $region44: #{tpu_custom_call.1} parent=27 // pred_fallthru
          _
      $region28: #{tpu_custom_call.1} parent=5 // pred_fallthru
        _
      %p458 = scmp.le.s32.totalorder 2, %s14
      // Predicated region
      $region45: #{tpu_custom_call.1} parent=5 // pred_check
        %p459 = pneg %p458
      $region46: #{tpu_custom_call.1} parent=5 // pred_check_branch
        %461 = sbr.rel (%p459) target = $region48
      $region47: #{tpu_custom_call.1} parent=5 // pred_region
        %s462 = ssub.s32 %s14, 2
        // Predicated region
        $region49: #{tpu_custom_call.1} parent=47 // pred_check
          %p463 = pneg %p111
        $region50: #{tpu_custom_call.1} parent=47 // pred_check_branch
          %465 = sbr.rel (%p463) target = $region52
        $region51: #{tpu_custom_call.1} parent=47 // pred_region
          %p466 = scmp.lt.s32.totalorder %s25, 1
          %s467 = scalar_select %p466, %s25, 1
          %s468 = smul.addr %s467, 2
          %s469 = smul.addr %s468, 8
          %s470 = scalar_lea.vmem %s2, %s469
        $region52: #{tpu_custom_call.1} parent=47 // pred_fallthru
          _
      $region48: #{tpu_custom_call.1} parent=5 // pred_fallthru
        _
    $region6: #{tpu_custom_call.1} parent=1 // loop_footer
      %s18 = sadd.s32 1, %s14
    $region7: #{tpu_custom_call.1} parent=1 // loop_footer_branch
      %13 = sbr.rel target = $region3
    $region8: #{tpu_custom_call.1} parent=1 // loop_exit
      _
    %471 = vsyncpa [#allocation3], 1
    %s472 = scalar_lea.sflag [#allocation3], 1
    %473 = vsyncpa %s472, 1
    %474 = vsyncpa [#allocation5], 1
    %s475 = scalar_lea.sflag [#allocation5], 1
    %476 = vsyncpa %s475, 1

</llo_original>
